<compile_context>
chip_gen: v7x
topology: tpu7x:2x2x1
jax: 0.10.0
libtpu: 0.0.40
codegen_flags: <defaults>
</compile_context>

<pallas_src>
import math
import jax
import jax.numpy as jnp
from jax.experimental import pallas as pl
from jax.experimental.pallas import tpu as pltpu


def _pick_tile(dim, pref):
    """Largest divisor of `dim` that is <= pref and a multiple of 128 (halving from
    pref); falls back to the full dim (single lane-dense block)."""
    t = pref
    while t >= 128:
        if dim % t == 0:
            return t
        t //= 2
    return dim


def mlp_kernel(x_ref, w1_ref, b1_ref, w2_ref, b2_ref, o_ref, h_ref):
    # Layer 1 is reused across every output (N) tile of the same batch tile, so only
    # compute it on the first N step (N is the inner grid axis).
    @pl.when(pl.program_id(1) == 0)
    def _():
        h = jnp.dot(x_ref[...], w1_ref[...], preferred_element_type=jnp.float32)
        # bias + ReLU on the f32 accumulator (f32 VPU path — required on v5e).
        h = jnp.maximum(h + b1_ref[...], 0.0)
        h_ref[...] = h.astype(h_ref.dtype)  # cast to bf16 only at the MXU boundary

    # Layer 2 (identity output non-linearity): (tb, H) @ (H, tn) + (1, tn)
    y = jnp.dot(h_ref[...], w2_ref[...], preferred_element_type=jnp.float32)
    o_ref[...] = (y + b2_ref[...]).astype(o_ref.dtype)


def mlp_forward(x, w1, b1, w2, b2, *, tb=256, tn=512, compute_dtype=jnp.bfloat16):
    """x: (B, D_in); w1: (D_in, H); b1: (H,); w2: (H, D_out); b2: (D_out,)."""
    B, D_in = x.shape
    H = w1.shape[1]
    D_out = w2.shape[1]
    assert tb % 8 == 0, "batch tile must be a multiple of 8 (sublane)"

    # Matmul operands in bf16 (halves DMA bytes + ~2x MXU throughput on v6e/v7x);
    # biases stay f32 for the f32 elementwise path.
    x_c = x.astype(compute_dtype)
    w1_c = w1.astype(compute_dtype)
    w2_c = w2.astype(compute_dtype)
    b1_2d = b1.astype(jnp.float32).reshape(1, H)
    b2_2d = b2.astype(jnp.float32).reshape(1, D_out)

    # Arbitrary batch sizes: pad up to the effective batch tile, slice afterwards.
    tb_eff = min(tb, pl.cdiv(B, 8) * 8)
    B_pad = pl.cdiv(B, tb_eff) * tb_eff
    if B_pad != B:
        x_c = jnp.pad(x_c, ((0, B_pad - B), (0, 0)))

    # Lane-dense output tile (multiple of 128, or the full D_out).
    tn_eff = _pick_tile(D_out, tn)

    nb = B_pad // tb_eff
    nn = D_out // tn_eff
    grid = (nb, nn)

    flops = 2 * B_pad * (D_in * H + H * D_out)
    itm = jnp.dtype(compute_dtype).itemsize
    bytes_accessed = (
        B_pad * D_in * itm                     # x
        + (D_in * H + H * D_out) * itm         # W1, W2
        + (H + D_out) * 4                      # biases (f32)
        + B_pad * D_out * 4                    # output (f32)
    )

    out = pl.pallas_call(
        mlp_kernel,
        out_shape=jax.ShapeDtypeStruct((B_pad, D_out), jnp.float32),
        grid_spec=pltpu.PrefetchScalarGridSpec(
            num_scalar_prefetch=0,
            grid=grid,
            in_specs=[
                pl.BlockSpec((tb_eff, D_in), lambda i, j: (i, 0)),   # x tile
                pl.BlockSpec((D_in, H), lambda i, j: (0, 0)),        # W1 (resident; constant
                pl.BlockSpec((1, H), lambda i, j: (0, 0)),           # b1  index_map => DMA'd once)
                pl.BlockSpec((H, tn_eff), lambda i, j: (0, j)),      # W2 N-tile
                pl.BlockSpec((1, tn_eff), lambda i, j: (0, j)),      # b2 N-tile
            ],
            out_specs=pl.BlockSpec((tb_eff, tn_eff), lambda i, j: (i, j)),
            scratch_shapes=[pltpu.VMEM((tb_eff, H), compute_dtype)],  # cached layer-1 output
        ),
        compiler_params=pltpu.CompilerParams(
            # batch axis parallel (megacore / v7x 2-TC sharding); N axis carries h scratch.
            dimension_semantics=("parallel", "arbitrary"),
        ),
        cost_estimate=pl.CostEstimate(
            flops=flops, transcendentals=0, bytes_accessed=bytes_accessed
        ),
    )(x_c, w1_c, b1_2d, w2_c, b2_2d)

    return out[:B] if B_pad != B else out


def init_mlp_params(key, input_dim, hidden_dim, output_dim, dtype=jnp.float32):
    # Deterministic synthetic init (fan-in scaled normal; not a checkpoint load).
    k1, k2 = jax.random.split(key, 2)
    w1 = jax.random.normal(k1, (input_dim, hidden_dim), dtype) / math.sqrt(input_dim)
    b1 = jnp.zeros((hidden_dim,), dtype)
    w2 = jax.random.normal(k2, (hidden_dim, output_dim), dtype) / math.sqrt(hidden_dim)
    b2 = jnp.zeros((output_dim,), dtype)
    return w1, b1, w2, b2


if __name__ == "__main__":
    # Small shapes consistent with the module (depth=1):
    #   two inputs concatenated on the last dim -> input_dim = 64 + 64 = 128
    #   hidden_dim = 256, output_dim = 512, batch = 16
    batch, d1, d2 = 16, 64, 64
    input_dim, hidden_dim, output_dim = d1 + d2, 256, 512

    key = jax.random.PRNGKey(0)
    kx1, kx2, kp = jax.random.split(key, 3)
    x1 = jax.random.normal(kx1, (batch, d1), jnp.float32)
    x2 = jax.random.normal(kx2, (batch, d2), jnp.float32)
    w1, b1, w2, b2 = init_mlp_params(kp, input_dim, hidden_dim, output_dim)

    # forward(*x): torch.cat(x, -1) is plain-JAX glue; hot path is the fused kernel.
    x = jnp.concatenate([x1, x2], axis=-1)
    y = mlp_forward(x, w1, b1, w2, b2)
    y = jax.block_until_ready(y)

    # Reference in plain JAX mimicking the kernel's bf16-operand / f32-accumulate path.
    f32 = jnp.float32
    xc = x.astype(jnp.bfloat16).astype(f32)
    w1c = w1.astype(jnp.bfloat16).astype(f32)
    w2c = w2.astype(jnp.bfloat16).astype(f32)
    h_ref = jnp.maximum(xc @ w1c + b1, 0.0)
    h_ref = h_ref.astype(jnp.bfloat16).astype(f32)
    y_ref = h_ref @ w2c + b2

    assert y.shape == (batch, output_dim)
    assert jnp.allclose(y, y_ref, atol=2e-2, rtol=2e-2), float(jnp.max(jnp.abs(y - y_ref)))

    print("KERNEL_OK")
</pallas_src>

<mosaic_0001>
module attributes {stable_mosaic.version = 11 : i64} {
  func.func @mlp_kernel(%arg0: i32, %arg1: i32, %arg2: memref<16x128xbf16, #tpu.memory_space<vmem>>, %arg3: memref<128x256xbf16, #tpu.memory_space<vmem>>, %arg4: memref<1x256xf32, #tpu.memory_space<vmem>>, %arg5: memref<256x512xbf16, #tpu.memory_space<vmem>>, %arg6: memref<1x512xf32, #tpu.memory_space<vmem>>, %arg7: memref<16x512xf32, #tpu.memory_space<vmem>>, %arg8: memref<16x256xbf16, #tpu.memory_space<vmem>>) attributes {dimension_semantics = [#tpu.dimension_semantics<parallel>, #tpu.dimension_semantics<arbitrary>], iteration_bounds = array<i64: 1, 1>, scalar_prefetch = 0 : i64, scratch_operands = 1 : i64, tpu.core_type = #tpu.core_type<tc>, window_params = [{transform_indices = @transform_0, window_bounds = array<i64: 16, 128>}, {pipeline_mode = #tpu.pipeline_mode<synchronous>, transform_indices = @transform_1, window_bounds = array<i64: 128, 256>}, {pipeline_mode = #tpu.pipeline_mode<synchronous>, transform_indices = @transform_2, window_bounds = array<i64: 1, 256>}, {transform_indices = @transform_3, window_bounds = array<i64: 256, 512>}, {transform_indices = @transform_4, window_bounds = array<i64: 1, 512>}, {transform_indices = @transform_5, window_bounds = array<i64: 16, 512>}]} {
    %c0_i32 = arith.constant 0 : i32
    %0 = arith.cmpi eq, %arg1, %c0_i32 : i32
    %1 = arith.extui %0 : i1 to i32
    %c0_i32_0 = arith.constant 0 : i32
    %2 = arith.cmpi ne, %1, %c0_i32_0 : i32
    scf.if %2 {
      %c0_8 = arith.constant 0 : index
      %c0_9 = arith.constant 0 : index
      %10 = vector.load %arg2[%c0_8, %c0_9] : memref<16x128xbf16, #tpu.memory_space<vmem>>, vector<16x128xbf16>
      %c0_10 = arith.constant 0 : index
      %c0_11 = arith.constant 0 : index
      %11 = vector.load %arg3[%c0_10, %c0_11] : memref<128x256xbf16, #tpu.memory_space<vmem>>, vector<128x256xbf16>
      %cst_12 = arith.constant dense<0.000000e+00> : vector<16x256xf32>
      %12 = tpu.matmul %10, %11, %cst_12 {dimension_numbers = #tpu.dot_dimension_numbers<[1], [0], [0], [1], [0, 0, 1, 1], [], []>} : vector<16x128xbf16>, vector<128x256xbf16>, vector<16x256xf32> -> vector<16x256xf32>
      %c0_13 = arith.constant 0 : index
      %c0_14 = arith.constant 0 : index
      %13 = vector.load %arg4[%c0_13, %c0_14] : memref<1x256xf32, #tpu.memory_space<vmem>>, vector<1x256xf32>
      %14 = vector.broadcast %13 : vector<1x256xf32> to vector<16x256xf32>
      %15 = arith.addf %12, %14 : vector<16x256xf32>
      %cst_15 = arith.constant 0.000000e+00 : f32
      %16 = vector.broadcast %cst_15 : f32 to vector<16x256xf32>
      %17 = arith.maximumf %15, %16 : vector<16x256xf32>
      %18 = arith.truncf %17 : vector<16x256xf32> to vector<16x256xbf16>
      %c0_16 = arith.constant 0 : index
      %c0_17 = arith.constant 0 : index
      %19 = vector.load %arg8[%c0_16, %c0_17] : memref<16x256xbf16, #tpu.memory_space<vmem>>, vector<16x256xbf16>
      tpu.vector_store %arg8[%c0_16, %c0_17], %18 {strides = array<i32>} : memref<16x256xbf16, #tpu.memory_space<vmem>>, vector<16x256xbf16>,
    } else {
    }
    %c0 = arith.constant 0 : index
    %c0_1 = arith.constant 0 : index
    %3 = vector.load %arg8[%c0, %c0_1] : memref<16x256xbf16, #tpu.memory_space<vmem>>, vector<16x256xbf16>
    %c0_2 = arith.constant 0 : index
    %c0_3 = arith.constant 0 : index
    %4 = vector.load %arg5[%c0_2, %c0_3] : memref<256x512xbf16, #tpu.memory_space<vmem>>, vector<256x512xbf16>
    %cst = arith.constant dense<0.000000e+00> : vector<16x512xf32>
    %5 = tpu.matmul %3, %4, %cst {dimension_numbers = #tpu.dot_dimension_numbers<[1], [0], [0], [1], [0, 0, 1, 1], [], []>} : vector<16x256xbf16>, vector<256x512xbf16>, vector<16x512xf32> -> vector<16x512xf32>
    %c0_4 = arith.constant 0 : index
    %c0_5 = arith.constant 0 : index
    %6 = vector.load %arg6[%c0_4, %c0_5] : memref<1x512xf32, #tpu.memory_space<vmem>>, vector<1x512xf32>
    %7 = vector.broadcast %6 : vector<1x512xf32> to vector<16x512xf32>
    %8 = arith.addf %5, %7 : vector<16x512xf32>
    %c0_6 = arith.constant 0 : index
    %c0_7 = arith.constant 0 : index
    %9 = vector.load %arg7[%c0_6, %c0_7] : memref<16x512xf32, #tpu.memory_space<vmem>>, vector<16x512xf32>
    tpu.vector_store %arg7[%c0_6, %c0_7], %8 {strides = array<i32>} : memref<16x512xf32, #tpu.memory_space<vmem>>, vector<16x512xf32>,
    return
  }
  func.func @transform_0(%arg0: i32, %arg1: i32) -> (i32, i32) {
    %c0_i32 = arith.constant 0 : i32
    %c0_i32_0 = arith.constant 0 : i32
    return %arg0, %c0_i32 : i32, i32
  }
  func.func @transform_1(%arg0: i32, %arg1: i32) -> (i32, i32) {
    %c0_i32 = arith.constant 0 : i32
    %c0_i32_0 = arith.constant 0 : i32
    %c0_i32_1 = arith.constant 0 : i32
    return %c0_i32, %c0_i32_0 : i32, i32
  }
  func.func @transform_2(%arg0: i32, %arg1: i32) -> (i32, i32) {
    %c0_i32 = arith.constant 0 : i32
    %c0_i32_0 = arith.constant 0 : i32
    %c0_i32_1 = arith.constant 0 : i32
    return %c0_i32, %c0_i32_0 : i32, i32
  }
  func.func @transform_3(%arg0: i32, %arg1: i32) -> (i32, i32) {
    %c0_i32 = arith.constant 0 : i32
    %c0_i32_0 = arith.constant 0 : i32
    return %c0_i32, %arg1 : i32, i32
  }
  func.func @transform_4(%arg0: i32, %arg1: i32) -> (i32, i32) {
    %c0_i32 = arith.constant 0 : i32
    %c0_i32_0 = arith.constant 0 : i32
    return %c0_i32, %arg1 : i32, i32
  }
  func.func @transform_5(%arg0: i32, %arg1: i32) -> (i32, i32) {
    %c0_i32 = arith.constant 0 : i32
    return %arg0, %arg1 : i32, i32
  }
}

</mosaic_0001>

<llo_original>
// kernel: tpu_custom_call.1
$region0: #{tpu_custom_call.1}
  #allocation0 [shape = 'u32[]', space=smem, size = 0x4, offset = 0x4, fixed_abs, tag = 'smem constant byte address 0x4 - core index']
  #allocation1 [shape = 'u32[144,128]{1,0:T(1,128)}', space=vmem, size = 0x12000, scoped, tag = 'internal scratch']
  #allocation2 [shape = 'bf16[16,256]{1,0:T(16,128)(2,1)}', space=vmem, size = 0x2000, scoped, tag = 'scratch operand']
  %s0 = inlined_call_operand.hbm [shape: bf16[16,128], index: 0, kind: input, shape index: {}]
  %s1 = inlined_call_operand.hbm [shape: bf16[128,256], index: 1, kind: input, shape index: {}]
  %s2 = inlined_call_operand.vmem [shape: f32[1,256], index: 2, kind: input, shape index: {}]
  %s3 = inlined_call_operand.hbm [shape: bf16[256,512], index: 3, kind: input, shape index: {}]
  %s4 = inlined_call_operand.vmem [shape: f32[1,512], index: 4, kind: input, shape index: {}]
  %s5 = inlined_call_operand.hbm [shape: f32[16,512], index: 5, kind: output, shape index: {}]
  %s6 = sld [smem:[#allocation0]]
  $region46: #{tpu_custom_call.1} parent=0
    _
  %s8 = ssub.s32 1, %s6
  %s9 = scalar_select 0, %s8, %s6
  $region1: #{tpu_custom_call.1} parent=0
    #allocation3 [shape = 'u8[4096]{0}', space=vmem, size = 0x1000, scoped, tag = 'input window, operand 0, single buffered']
    #allocation4 [shape = 's32[1]{0}', space=sflag, size = 0x4, scoped, tag = 'scoped memory for tpu_custom_call.1']
    #allocation5 [shape = 's32[1]{0}', space=sflag, size = 0x4, scoped, tag = 'scoped memory for tpu_custom_call.1']
    #allocation6 [shape = 'u8[65536]{0}', space=vmem, size = 0x10000, scoped, tag = 'input window, operand 1, single buffered']
    #allocation7 [shape = 's32[1]{0}', space=sflag, size = 0x4, scoped, tag = 'scoped memory for tpu_custom_call.1']
    #allocation8 [shape = 'u8[262144]{0}', space=vmem, size = 0x40000, scoped, tag = 'input window, operand 3, single buffered']
    #allocation9 [shape = 'u8[32768]{0}', space=vmem, size = 0x8000, scoped, tag = 'output window, operand 0, single buffered']
    %10 = vsyncpa [#allocation4], 0
    %11 = vsyncpa [#allocation7], 0
    %12 = vsyncpa [#allocation5], 0
    // Predicated region
    $region2: #{tpu_custom_call.1} parent=1 // pred_check
      _
    $region3: #{tpu_custom_call.1} parent=1 // pred_check_branch
      %14 = sbr.rel (0) target = $region5
    $region4: #{tpu_custom_call.1} parent=1 // pred_region
      %s16 = ssub.s32 128, 128
      %17 = vsyncadd [#allocation4], %s16
      %s18 = sshll.u32 [#allocation3], 4
      %s19 = int_to_ptr.vmem [resolvable:$true] %s18
      %24 = dma.hbm_to_vmem [thread:$0]  %s0, 128, %s19, [#allocation4], 64, 64, 4
    $region5: #{tpu_custom_call.1} parent=1 // pred_fallthru
      _
    // Predicated region
    $region6: #{tpu_custom_call.1} parent=1 // pred_check
      _
    $region7: #{tpu_custom_call.1} parent=1 // pred_check_branch
      %26 = sbr.rel (0) target = $region9
    $region8: #{tpu_custom_call.1} parent=1 // pred_region
      %s28 = ssub.s32 2048, 2048
      %29 = vsyncadd [#allocation7], %s28
      %s30 = sshll.u32 [#allocation6], 4
      %s31 = int_to_ptr.vmem [resolvable:$true] %s30
      %36 = dma.hbm_to_vmem [thread:$0]  %s1, 2048, %s31, [#allocation7], 128, 128, 8
    $region9: #{tpu_custom_call.1} parent=1 // pred_fallthru
      _
    // Predicated region
    $region10: #{tpu_custom_call.1} parent=1 // pred_check
      _
    $region11: #{tpu_custom_call.1} parent=1 // pred_check_branch
      %38 = sbr.rel (0) target = $region13
    $region12: #{tpu_custom_call.1} parent=1 // pred_region
      _
    $region13: #{tpu_custom_call.1} parent=1 // pred_fallthru
      _
    // Predicated region
    $region14: #{tpu_custom_call.1} parent=1 // pred_check
      _
    $region15: #{tpu_custom_call.1} parent=1 // pred_check_branch
      %40 = sbr.rel (0) target = $region17
    $region16: #{tpu_custom_call.1} parent=1 // pred_region
      %s42 = ssub.s32 8192, 8192
      %43 = vsyncadd [#allocation7], %s42
      %s44 = sshll.u32 [#allocation8], 4
      %s45 = int_to_ptr.vmem [resolvable:$true] %s44
      %50 = dma.hbm_to_vmem [thread:$0]  %s3, 8192, %s45, [#allocation7], 256, 256, 16
    $region17: #{tpu_custom_call.1} parent=1 // pred_fallthru
      _
    // Predicated region
    $region18: #{tpu_custom_call.1} parent=1 // pred_check
      _
    $region19: #{tpu_custom_call.1} parent=1 // pred_check_branch
      %52 = sbr.rel (0) target = $region21
    $region20: #{tpu_custom_call.1} parent=1 // pred_region
      _
    $region21: #{tpu_custom_call.1} parent=1 // pred_fallthru
      _
    // Predicated region
    $region22: #{tpu_custom_call.1} parent=1 // pred_check
      _
    $region23: #{tpu_custom_call.1} parent=1 // pred_check_branch
      %54 = sbr.rel (0) target = $region25
    $region24: #{tpu_custom_call.1} parent=1 // pred_region
      %55 = dma.done [#allocation4], 128
    $region25: #{tpu_custom_call.1} parent=1 // pred_fallthru
      _
    // Predicated region
    $region26: #{tpu_custom_call.1} parent=1 // pred_check
      _
    $region27: #{tpu_custom_call.1} parent=1 // pred_check_branch
      %57 = sbr.rel (0) target = $region29
    $region28: #{tpu_custom_call.1} parent=1 // pred_region
      %58 = dma.done [#allocation7], 2048
    $region29: #{tpu_custom_call.1} parent=1 // pred_fallthru
      _
    // Predicated region
    $region30: #{tpu_custom_call.1} parent=1 // pred_check
      _
    $region31: #{tpu_custom_call.1} parent=1 // pred_check_branch
      %60 = sbr.rel (0) target = $region33
    $region32: #{tpu_custom_call.1} parent=1 // pred_region
      %61 = dma.done [#allocation7], 8192
    $region33: #{tpu_custom_call.1} parent=1 // pred_fallthru
      _
    %p63 = scmp.eq.s32.totalorder 0, 0
    // Predicated region
    $region34: #{tpu_custom_call.1} parent=1 // pred_check
      %p64 = pneg %p63
    $region35: #{tpu_custom_call.1} parent=1 // pred_check_branch
      %66 = sbr.rel (%p64) target = $region37
    $region36: #{tpu_custom_call.1} parent=1 // pred_region
      %v67 = vld [vmem:[#allocation3] sm:$0xf]
      %v68 = vld [vmem:[#allocation3 + $0x4] sm:$0xf]
      %v69 = vld [vmem:[#allocation6] sm:$0xff]
      %v70 = vld [vmem:[#allocation6 + $0x8] sm:$0xff]
      %v71 = vld [vmem:[#allocation6 + $0x10] sm:$0xff]
      %v72 = vld [vmem:[#allocation6 + $0x18] sm:$0xff]
      %v73 = vld [vmem:[#allocation6 + $0x20] sm:$0xff]
      %v74 = vld [vmem:[#allocation6 + $0x28] sm:$0xff]
      %v75 = vld [vmem:[#allocation6 + $0x30] sm:$0xff]
      %v76 = vld [vmem:[#allocation6 + $0x38] sm:$0xff]
      %v77 = vld [vmem:[#allocation6 + $0x40] sm:$0xff]
      %v78 = vld [vmem:[#allocation6 + $0x48] sm:$0xff]
      %v79 = vld [vmem:[#allocation6 + $0x50] sm:$0xff]
      %v80 = vld [vmem:[#allocation6 + $0x58] sm:$0xff]
      %v81 = vld [vmem:[#allocation6 + $0x60] sm:$0xff]
      %v82 = vld [vmem:[#allocation6 + $0x68] sm:$0xff]
      %v83 = vld [vmem:[#allocation6 + $0x70] sm:$0xff]
      %v84 = vld [vmem:[#allocation6 + $0x78] sm:$0xff]
      %v85 = vld [vmem:[%s2] sm:$0x3]
      %v87 = vlaneseq
      %v88 = vshrl.u32 %v87, 7
      %v89 = vsub.s32 0, %v88
      %v90 = vrot.slane %v85, %v89
      %v91 = vlaneseq
      %v92 = vshrl.u32 %v91, 7
      %v93 = vsub.s32 1, %v92
      %v94 = vrot.slane %v85, %v93
      %v99 = vunpack.c.l.b16 %v67
      %v100 = vunpack.c.l.b16 %v68
      %v101 = vpack.c.b16 %v100, %v99
      %v119 = vunpack.c.l.b16 %v69
      %v120 = vunpack.c.h.b16 %v69
      %v121 = vunpack.c.l.b16 %v70
      %v122 = vunpack.c.h.b16 %v70
      %v123 = vunpack.c.l.b16 %v71
      %v124 = vunpack.c.h.b16 %v71
      %v125 = vunpack.c.l.b16 %v72
      %v126 = vunpack.c.h.b16 %v72
      %v127 = vunpack.c.l.b16 %v73
      %v128 = vunpack.c.h.b16 %v73
      %v129 = vunpack.c.l.b16 %v74
      %v130 = vunpack.c.h.b16 %v74
      %v131 = vunpack.c.l.b16 %v75
      %v132 = vunpack.c.h.b16 %v75
      %v133 = vunpack.c.l.b16 %v76
      %v134 = vunpack.c.h.b16 %v76
      %v135 = vunpack.c.l.b16 %v77
      %v136 = vunpack.c.h.b16 %v77
      %v137 = vunpack.c.l.b16 %v78
      %v138 = vunpack.c.h.b16 %v78
      %v139 = vunpack.c.l.b16 %v79
      %v140 = vunpack.c.h.b16 %v79
      %v141 = vunpack.c.l.b16 %v80
      %v142 = vunpack.c.h.b16 %v80
      %v143 = vunpack.c.l.b16 %v81
      %v144 = vunpack.c.h.b16 %v81
      %v145 = vunpack.c.l.b16 %v82
      %v146 = vunpack.c.h.b16 %v82
      %v147 = vunpack.c.l.b16 %v83
      %v148 = vunpack.c.h.b16 %v83
      %v149 = vunpack.c.l.b16 %v84
      %v150 = vunpack.c.h.b16 %v84
      %v151 = vpack.c.b16 %v121, %v119
      %v152 = vpack.c.b16 %v122, %v120
      %v153 = vpack.c.b16 %v125, %v123
      %v154 = vpack.c.b16 %v126, %v124
      %v155 = vpack.c.b16 %v129, %v127
      %v156 = vpack.c.b16 %v130, %v128
      %v157 = vpack.c.b16 %v133, %v131
      %v158 = vpack.c.b16 %v134, %v132
      %v159 = vpack.c.b16 %v137, %v135
      %v160 = vpack.c.b16 %v138, %v136
      %v161 = vpack.c.b16 %v141, %v139
      %v162 = vpack.c.b16 %v142, %v140
      %v163 = vpack.c.b16 %v145, %v143
      %v164 = vpack.c.b16 %v146, %v144
      %v165 = vpack.c.b16 %v149, %v147
      %v166 = vpack.c.b16 %v150, %v148
      %183 = vmatprep.subr.bf16.mxu0 %v152
      %184 = vmatpush1.bf16.msra.mxu0 %v151
      %185 = vmatprep.subr.bf16.mxu0 %v154
      %186 = vmatpush1.bf16.msra.mxu0 %v153
      %187 = vmatprep.subr.bf16.mxu0 %v156
      %188 = vmatpush1.bf16.msra.mxu0 %v155
      %189 = vmatprep.subr.bf16.mxu0 %v158
      %190 = vmatpush1.bf16.msra.mxu0 %v157
      %191 = vmatprep.subr.bf16.mxu0 %v160
      %192 = vmatpush1.bf16.msra.mxu0 %v159
      %193 = vmatprep.subr.bf16.mxu0 %v162
      %194 = vmatpush1.bf16.msra.mxu0 %v161
      %195 = vmatprep.subr.bf16.mxu0 %v164
      %196 = vmatpush1.bf16.msra.mxu0 %v163
      %197 = vmatprep.subr.bf16.mxu0 %v166
      %198 = vmatpush1.bf16.msra.mxu0 %v165
      %199 = vmatprep.subr.bf16.mxu0 0
      %200 = vmatpush1.bf16.msra.mxu0 0
      %201 = vmatprep.subr.bf16.mxu0 0
      %202 = vmatpush1.bf16.msra.mxu0 0
      %203 = vmatprep.subr.bf16.mxu0 0
      %204 = vmatpush1.bf16.msra.mxu0 0
      %205 = vmatprep.subr.bf16.mxu0 0
      %206 = vmatpush1.bf16.msra.mxu0 0
      %207 = vmatprep.subr.bf16.mxu0 0
      %208 = vmatpush1.bf16.msra.mxu0 0
      %209 = vmatprep.subr.bf16.mxu0 0
      %210 = vmatpush1.bf16.msra.mxu0 0
      %211 = vmatprep.subr.bf16.mxu0 0
      %212 = vmatpush1.bf16.msra.mxu0 0
      %213 = vmatprep.subr.bf16.mxu0 0
      %214 = vmatpush1.bf16.msra.mxu0 0
      %215 = vmatprep.mubr.bf16.mxu0 0
      %216 = vmatmul.mubr.bf16.gmra.mrb[0].mxu0 %v101
      %v217 = vpop.f32.mrb[0].mxu0
      %v218 = vadd.f32 %v90, %v217
      %v219 = vpop.f32.mrb[0].mxu0
      %v220 = vadd.f32 %v94, %v219
      %v221 = vpop.f32.mrb[0].mxu0
      %v222 = vadd.f32 %v90, %v221
      %v223 = vpop.f32.mrb[0].mxu0
      %v224 = vadd.f32 %v94, %v223
      %225 = vdwg.mxu0
      %v226 = vmax.f32 %v218, 0.0
      %v227 = vmax.f32 %v220, 0.0
      %v228 = vmax.f32 %v222, 0.0
      %v229 = vmax.f32 %v224, 0.0
      %v230 = vpack.c.bf16 %v228, %v226
      %v231 = vpack.c.bf16 %v229, %v227
      %232 = vst [vmem:[#allocation2] sm:$0xff] %v230
      %233 = vst [vmem:[#allocation2 + $0x8] sm:$0xff] %v231
    $region37: #{tpu_custom_call.1} parent=1 // pred_fallthru
      _
    %v234 = vld [vmem:[#allocation2] sm:$0xff]
    %v235 = vld [vmem:[#allocation2 + $0x8] sm:$0xff]
    %v236 = vld [vmem:[#allocation8] sm:$0xff]
    %v237 = vld [vmem:[#allocation8 + $0x8] sm:$0xff]
    %v238 = vld [vmem:[#allocation8 + $0x10] sm:$0xff]
    %v239 = vld [vmem:[#allocation8 + $0x18] sm:$0xff]
    %v240 = vld [vmem:[#allocation8 + $0x20] sm:$0xff]
    %v241 = vld [vmem:[#allocation8 + $0x28] sm:$0xff]
    %v242 = vld [vmem:[#allocation8 + $0x30] sm:$0xff]
    %v243 = vld [vmem:[#allocation8 + $0x38] sm:$0xff]
    %v244 = vld [vmem:[#allocation8 + $0x40] sm:$0xff]
    %v245 = vld [vmem:[#allocation8 + $0x48] sm:$0xff]
    %v246 = vld [vmem:[#allocation8 + $0x50] sm:$0xff]
    %v247 = vld [vmem:[#allocation8 + $0x58] sm:$0xff]
    %v248 = vld [vmem:[#allocation8 + $0x60] sm:$0xff]
    %v249 = vld [vmem:[#allocation8 + $0x68] sm:$0xff]
    %v250 = vld [vmem:[#allocation8 + $0x70] sm:$0xff]
    %v251 = vld [vmem:[#allocation8 + $0x78] sm:$0xff]
    %v252 = vld [vmem:[#allocation8 + $0x80] sm:$0xff]
    %v253 = vld [vmem:[#allocation8 + $0x88] sm:$0xff]
    %v254 = vld [vmem:[#allocation8 + $0x90] sm:$0xff]
    %v255 = vld [vmem:[#allocation8 + $0x98] sm:$0xff]
    %v256 = vld [vmem:[#allocation8 + $0xa0] sm:$0xff]
    %v257 = vld [vmem:[#allocation8 + $0xa8] sm:$0xff]
    %v258 = vld [vmem:[#allocation8 + $0xb0] sm:$0xff]
    %v259 = vld [vmem:[#allocation8 + $0xb8] sm:$0xff]
    %v260 = vld [vmem:[#allocation8 + $0xc0] sm:$0xff]
    %v261 = vld [vmem:[#allocation8 + $0xc8] sm:$0xff]
    %v262 = vld [vmem:[#allocation8 + $0xd0] sm:$0xff]
    %v263 = vld [vmem:[#allocation8 + $0xd8] sm:$0xff]
    %v264 = vld [vmem:[#allocation8 + $0xe0] sm:$0xff]
    %v265 = vld [vmem:[#allocation8 + $0xe8] sm:$0xff]
    %v266 = vld [vmem:[#allocation8 + $0xf0] sm:$0xff]
    %v267 = vld [vmem:[#allocation8 + $0xf8] sm:$0xff]
    %v268 = vld [vmem:[#allocation8 + $0x100] sm:$0xff]
    %v269 = vld [vmem:[#allocation8 + $0x108] sm:$0xff]
    %v270 = vld [vmem:[#allocation8 + $0x110] sm:$0xff]
    %v271 = vld [vmem:[#allocation8 + $0x118] sm:$0xff]
    %v272 = vld [vmem:[#allocation8 + $0x120] sm:$0xff]
    %v273 = vld [vmem:[#allocation8 + $0x128] sm:$0xff]
    %v274 = vld [vmem:[#allocation8 + $0x130] sm:$0xff]
    %v275 = vld [vmem:[#allocation8 + $0x138] sm:$0xff]
    %v276 = vld [vmem:[#allocation8 + $0x140] sm:$0xff]
    %v277 = vld [vmem:[#allocation8 + $0x148] sm:$0xff]
    %v278 = vld [vmem:[#allocation8 + $0x150] sm:$0xff]
    %v279 = vld [vmem:[#allocation8 + $0x158] sm:$0xff]
    %v280 = vld [vmem:[#allocation8 + $0x160] sm:$0xff]
    %v281 = vld [vmem:[#allocation8 + $0x168] sm:$0xff]
    %v282 = vld [vmem:[#allocation8 + $0x170] sm:$0xff]
    %v283 = vld [vmem:[#allocation8 + $0x178] sm:$0xff]
    %v284 = vld [vmem:[#allocation8 + $0x180] sm:$0xff]
    %v285 = vld [vmem:[#allocation8 + $0x188] sm:$0xff]
    %v286 = vld [vmem:[#allocation8 + $0x190] sm:$0xff]
    %v287 = vld [vmem:[#allocation8 + $0x198] sm:$0xff]
    %v288 = vld [vmem:[#allocation8 + $0x1a0] sm:$0xff]
    %v289 = vld [vmem:[#allocation8 + $0x1a8] sm:$0xff]
    %v290 = vld [vmem:[#allocation8 + $0x1b0] sm:$0xff]
    %v291 = vld [vmem:[#allocation8 + $0x1b8] sm:$0xff]
    %v292 = vld [vmem:[#allocation8 + $0x1c0] sm:$0xff]
    %v293 = vld [vmem:[#allocation8 + $0x1c8] sm:$0xff]
    %v294 = vld [vmem:[#allocation8 + $0x1d0] sm:$0xff]
    %v295 = vld [vmem:[#allocation8 + $0x1d8] sm:$0xff]
    %v296 = vld [vmem:[#allocation8 + $0x1e0] sm:$0xff]
    %v297 = vld [vmem:[#allocation8 + $0x1e8] sm:$0xff]
    %v298 = vld [vmem:[#allocation8 + $0x1f0] sm:$0xff]
    %v299 = vld [vmem:[#allocation8 + $0x1f8] sm:$0xff]
    %v300 = vld [vmem:[%s4] sm:$0xf]
    %v302 = vlaneseq
    %v303 = vshrl.u32 %v302, 7
    %v304 = vsub.s32 0, %v303
    %v305 = vrot.slane %v300, %v304
    %v306 = vlaneseq
    %v307 = vshrl.u32 %v306, 7
    %v308 = vsub.s32 1, %v307
    %v309 = vrot.slane %v300, %v308
    %v310 = vlaneseq
    %v311 = vshrl.u32 %v310, 7
    %v312 = vsub.s32 2, %v311
    %v313 = vrot.slane %v300, %v312
    %v314 = vlaneseq
    %v315 = vshrl.u32 %v314, 7
    %v316 = vsub.s32 3, %v315
    %v317 = vrot.slane %v300, %v316
    %v386 = vunpack.c.l.b16 %v236
    %v387 = vunpack.c.h.b16 %v236
    %v388 = vunpack.c.l.b16 %v237
    %v389 = vunpack.c.h.b16 %v237
    %v390 = vunpack.c.l.b16 %v238
    %v391 = vunpack.c.h.b16 %v238
    %v392 = vunpack.c.l.b16 %v239
    %v393 = vunpack.c.h.b16 %v239
    %v394 = vunpack.c.l.b16 %v240
    %v395 = vunpack.c.h.b16 %v240
    %v396 = vunpack.c.l.b16 %v241
    %v397 = vunpack.c.h.b16 %v241
    %v398 = vunpack.c.l.b16 %v242
    %v399 = vunpack.c.h.b16 %v242
    %v400 = vunpack.c.l.b16 %v243
    %v401 = vunpack.c.h.b16 %v243
    %v402 = vunpack.c.l.b16 %v244
    %v403 = vunpack.c.h.b16 %v244
    %v404 = vunpack.c.l.b16 %v245
    %v405 = vunpack.c.h.b16 %v245
    %v406 = vunpack.c.l.b16 %v246
    %v407 = vunpack.c.h.b16 %v246
    %v408 = vunpack.c.l.b16 %v247
    %v409 = vunpack.c.h.b16 %v247
    %v410 = vunpack.c.l.b16 %v248
    %v411 = vunpack.c.h.b16 %v248
    %v412 = vunpack.c.l.b16 %v249
    %v413 = vunpack.c.h.b16 %v249
    %v414 = vunpack.c.l.b16 %v250
    %v415 = vunpack.c.h.b16 %v250
    %v416 = vunpack.c.l.b16 %v251
    %v417 = vunpack.c.h.b16 %v251
    %v418 = vunpack.c.l.b16 %v252
    %v419 = vunpack.c.h.b16 %v252
    %v420 = vunpack.c.l.b16 %v253
    %v421 = vunpack.c.h.b16 %v253
    %v422 = vunpack.c.l.b16 %v254
    %v423 = vunpack.c.h.b16 %v254
    %v424 = vunpack.c.l.b16 %v255
    %v425 = vunpack.c.h.b16 %v255
    %v426 = vunpack.c.l.b16 %v256
    %v427 = vunpack.c.h.b16 %v256
    %v428 = vunpack.c.l.b16 %v257
    %v429 = vunpack.c.h.b16 %v257
    %v430 = vunpack.c.l.b16 %v258
    %v431 = vunpack.c.h.b16 %v258
    %v432 = vunpack.c.l.b16 %v259
    %v433 = vunpack.c.h.b16 %v259
    %v434 = vunpack.c.l.b16 %v260
    %v435 = vunpack.c.h.b16 %v260
    %v436 = vunpack.c.l.b16 %v261
    %v437 = vunpack.c.h.b16 %v261
    %v438 = vunpack.c.l.b16 %v262
    %v439 = vunpack.c.h.b16 %v262
    %v440 = vunpack.c.l.b16 %v263
    %v441 = vunpack.c.h.b16 %v263
    %v442 = vunpack.c.l.b16 %v264
    %v443 = vunpack.c.h.b16 %v264
    %v444 = vunpack.c.l.b16 %v265
    %v445 = vunpack.c.h.b16 %v265
    %v446 = vunpack.c.l.b16 %v266
    %v447 = vunpack.c.h.b16 %v266
    %v448 = vunpack.c.l.b16 %v267
    %v449 = vunpack.c.h.b16 %v267
    %v450 = vunpack.c.l.b16 %v268
    %v451 = vunpack.c.h.b16 %v268
    %v452 = vunpack.c.l.b16 %v269
    %v453 = vunpack.c.h.b16 %v269
    %v454 = vunpack.c.l.b16 %v270
    %v455 = vunpack.c.h.b16 %v270
    %v456 = vunpack.c.l.b16 %v271
    %v457 = vunpack.c.h.b16 %v271
    %v458 = vunpack.c.l.b16 %v272
    %v459 = vunpack.c.h.b16 %v272
    %v460 = vunpack.c.l.b16 %v273
    %v461 = vunpack.c.h.b16 %v273
    %v462 = vunpack.c.l.b16 %v274
    %v463 = vunpack.c.h.b16 %v274
    %v464 = vunpack.c.l.b16 %v275
    %v465 = vunpack.c.h.b16 %v275
    %v466 = vunpack.c.l.b16 %v276
    %v467 = vunpack.c.h.b16 %v276
    %v468 = vunpack.c.l.b16 %v277
    %v469 = vunpack.c.h.b16 %v277
    %v470 = vunpack.c.l.b16 %v278
    %v471 = vunpack.c.h.b16 %v278
    %v472 = vunpack.c.l.b16 %v279
    %v473 = vunpack.c.h.b16 %v279
    %v474 = vunpack.c.l.b16 %v280
    %v475 = vunpack.c.h.b16 %v280
    %v476 = vunpack.c.l.b16 %v281
    %v477 = vunpack.c.h.b16 %v281
    %v478 = vunpack.c.l.b16 %v282
    %v479 = vunpack.c.h.b16 %v282
    %v480 = vunpack.c.l.b16 %v283
    %v481 = vunpack.c.h.b16 %v283
    %v482 = vunpack.c.l.b16 %v284
    %v483 = vunpack.c.h.b16 %v284
    %v484 = vunpack.c.l.b16 %v285
    %v485 = vunpack.c.h.b16 %v285
    %v486 = vunpack.c.l.b16 %v286
    %v487 = vunpack.c.h.b16 %v286
    %v488 = vunpack.c.l.b16 %v287
    %v489 = vunpack.c.h.b16 %v287
    %v490 = vunpack.c.l.b16 %v288
    %v491 = vunpack.c.h.b16 %v288
    %v492 = vunpack.c.l.b16 %v289
    %v493 = vunpack.c.h.b16 %v289
    %v494 = vunpack.c.l.b16 %v290
    %v495 = vunpack.c.h.b16 %v290
    %v496 = vunpack.c.l.b16 %v291
    %v497 = vunpack.c.h.b16 %v291
    %v498 = vunpack.c.l.b16 %v292
    %v499 = vunpack.c.h.b16 %v292
    %v500 = vunpack.c.l.b16 %v293
    %v501 = vunpack.c.h.b16 %v293
    %v502 = vunpack.c.l.b16 %v294
    %v503 = vunpack.c.h.b16 %v294
    %v504 = vunpack.c.l.b16 %v295
    %v505 = vunpack.c.h.b16 %v295
    %v506 = vunpack.c.l.b16 %v296
    %v507 = vunpack.c.h.b16 %v296
    %v508 = vunpack.c.l.b16 %v297
    %v509 = vunpack.c.h.b16 %v297
    %v510 = vunpack.c.l.b16 %v298
    %v511 = vunpack.c.h.b16 %v298
    %v512 = vunpack.c.l.b16 %v299
    %v513 = vunpack.c.h.b16 %v299
    %v514 = vpack.c.b16 %v390, %v386
    %v515 = vpack.c.b16 %v391, %v387
    %v516 = vpack.c.b16 %v392, %v388
    %v517 = vpack.c.b16 %v393, %v389
    %v518 = vpack.c.b16 %v398, %v394
    %v519 = vpack.c.b16 %v399, %v395
    %v520 = vpack.c.b16 %v400, %v396
    %v521 = vpack.c.b16 %v401, %v397
    %v522 = vpack.c.b16 %v406, %v402
    %v523 = vpack.c.b16 %v407, %v403
    %v524 = vpack.c.b16 %v408, %v404
    %v525 = vpack.c.b16 %v409, %v405
    %v526 = vpack.c.b16 %v414, %v410
    %v527 = vpack.c.b16 %v415, %v411
    %v528 = vpack.c.b16 %v416, %v412
    %v529 = vpack.c.b16 %v417, %v413
    %v530 = vpack.c.b16 %v422, %v418
    %v531 = vpack.c.b16 %v423, %v419
    %v532 = vpack.c.b16 %v424, %v420
    %v533 = vpack.c.b16 %v425, %v421
    %v534 = vpack.c.b16 %v430, %v426
    %v535 = vpack.c.b16 %v431, %v427
    %v536 = vpack.c.b16 %v432, %v428
    %v537 = vpack.c.b16 %v433, %v429
    %v538 = vpack.c.b16 %v438, %v434
    %v539 = vpack.c.b16 %v439, %v435
    %v540 = vpack.c.b16 %v440, %v436
    %v541 = vpack.c.b16 %v441, %v437
    %v542 = vpack.c.b16 %v446, %v442
    %v543 = vpack.c.b16 %v447, %v443
    %v544 = vpack.c.b16 %v448, %v444
    %v545 = vpack.c.b16 %v449, %v445
    %v546 = vpack.c.b16 %v454, %v450
    %v547 = vpack.c.b16 %v455, %v451
    %v548 = vpack.c.b16 %v456, %v452
    %v549 = vpack.c.b16 %v457, %v453
    %v550 = vpack.c.b16 %v462, %v458
    %v551 = vpack.c.b16 %v463, %v459
    %v552 = vpack.c.b16 %v464, %v460
    %v553 = vpack.c.b16 %v465, %v461
    %v554 = vpack.c.b16 %v470, %v466
    %v555 = vpack.c.b16 %v471, %v467
    %v556 = vpack.c.b16 %v472, %v468
    %v557 = vpack.c.b16 %v473, %v469
    %v558 = vpack.c.b16 %v478, %v474
    %v559 = vpack.c.b16 %v479, %v475
    %v560 = vpack.c.b16 %v480, %v476
    %v561 = vpack.c.b16 %v481, %v477
    %v562 = vpack.c.b16 %v486, %v482
    %v563 = vpack.c.b16 %v487, %v483
    %v564 = vpack.c.b16 %v488, %v484
    %v565 = vpack.c.b16 %v489, %v485
    %v566 = vpack.c.b16 %v494, %v490
    %v567 = vpack.c.b16 %v495, %v491
    %v568 = vpack.c.b16 %v496, %v492
    %v569 = vpack.c.b16 %v497, %v493
    %v570 = vpack.c.b16 %v502, %v498
    %v571 = vpack.c.b16 %v503, %v499
    %v572 = vpack.c.b16 %v504, %v500
    %v573 = vpack.c.b16 %v505, %v501
    %v574 = vpack.c.b16 %v510, %v506
    %v575 = vpack.c.b16 %v511, %v507
    %v576 = vpack.c.b16 %v512, %v508
    %v577 = vpack.c.b16 %v513, %v509
    %642 = vmatprep.subr.bf16.mxu0 %v515
    %643 = vmatpush1.bf16.msra.mxu0 %v514
    %644 = vmatprep.subr.bf16.mxu0 %v519
    %645 = vmatpush1.bf16.msra.mxu0 %v518
    %646 = vmatprep.subr.bf16.mxu0 %v523
    %647 = vmatpush1.bf16.msra.mxu0 %v522
    %648 = vmatprep.subr.bf16.mxu0 %v527
    %649 = vmatpush1.bf16.msra.mxu0 %v526
    %650 = vmatprep.subr.bf16.mxu0 %v531
    %651 = vmatpush1.bf16.msra.mxu0 %v530
    %652 = vmatprep.subr.bf16.mxu0 %v535
    %653 = vmatpush1.bf16.msra.mxu0 %v534
    %654 = vmatprep.subr.bf16.mxu0 %v539
    %655 = vmatpush1.bf16.msra.mxu0 %v538
    %656 = vmatprep.subr.bf16.mxu0 %v543
    %657 = vmatpush1.bf16.msra.mxu0 %v542
    %658 = vmatprep.subr.bf16.mxu0 %v547
    %659 = vmatpush1.bf16.msra.mxu0 %v546
    %660 = vmatprep.subr.bf16.mxu0 %v551
    %661 = vmatpush1.bf16.msra.mxu0 %v550
    %662 = vmatprep.subr.bf16.mxu0 %v555
    %663 = vmatpush1.bf16.msra.mxu0 %v554
    %664 = vmatprep.subr.bf16.mxu0 %v559
    %665 = vmatpush1.bf16.msra.mxu0 %v558
    %666 = vmatprep.subr.bf16.mxu0 %v563
    %667 = vmatpush1.bf16.msra.mxu0 %v562
    %668 = vmatprep.subr.bf16.mxu0 %v567
    %669 = vmatpush1.bf16.msra.mxu0 %v566
    %670 = vmatprep.subr.bf16.mxu0 %v571
    %671 = vmatpush1.bf16.msra.mxu0 %v570
    %672 = vmatprep.subr.bf16.mxu0 %v575
    %673 = vmatpush1.bf16.msra.mxu0 %v574
    %674 = vmatprep.mubr.bf16.mxu0 %v235
    %675 = vmatmul.mubr.bf16.gmra.mrb[0].mxu0 %v234
    %v676 = vpop.f32.mrb[0].mxu0
    %v677 = vadd.f32 %v305, %v676
    %v678 = vpop.f32.mrb[0].mxu0
    %v679 = vadd.f32 %v309, %v678
    %v680 = vpop.f32.mrb[0].mxu0
    %v681 = vadd.f32 %v305, %v680
    %v682 = vpop.f32.mrb[0].mxu0
    %v683 = vadd.f32 %v309, %v682
    %684 = vdwg.mxu0
    %685 = vmatprep.subr.bf16.mxu0 %v517
    %686 = vmatpush1.bf16.msra.mxu0 %v516
    %687 = vmatprep.subr.bf16.mxu0 %v521
    %688 = vmatpush1.bf16.msra.mxu0 %v520
    %689 = vmatprep.subr.bf16.mxu0 %v525
    %690 = vmatpush1.bf16.msra.mxu0 %v524
    %691 = vmatprep.subr.bf16.mxu0 %v529
    %692 = vmatpush1.bf16.msra.mxu0 %v528
    %693 = vmatprep.subr.bf16.mxu0 %v533
    %694 = vmatpush1.bf16.msra.mxu0 %v532
    %695 = vmatprep.subr.bf16.mxu0 %v537
    %696 = vmatpush1.bf16.msra.mxu0 %v536
    %697 = vmatprep.subr.bf16.mxu0 %v541
    %698 = vmatpush1.bf16.msra.mxu0 %v540
    %699 = vmatprep.subr.bf16.mxu0 %v545
    %700 = vmatpush1.bf16.msra.mxu0 %v544
    %701 = vmatprep.subr.bf16.mxu0 %v549
    %702 = vmatpush1.bf16.msra.mxu0 %v548
    %703 = vmatprep.subr.bf16.mxu0 %v553
    %704 = vmatpush1.bf16.msra.mxu0 %v552
    %705 = vmatprep.subr.bf16.mxu0 %v557
    %706 = vmatpush1.bf16.msra.mxu0 %v556
    %707 = vmatprep.subr.bf16.mxu0 %v561
    %708 = vmatpush1.bf16.msra.mxu0 %v560
    %709 = vmatprep.subr.bf16.mxu0 %v565
    %710 = vmatpush1.bf16.msra.mxu0 %v564
    %711 = vmatprep.subr.bf16.mxu0 %v569
    %712 = vmatpush1.bf16.msra.mxu0 %v568
    %713 = vmatprep.subr.bf16.mxu0 %v573
    %714 = vmatpush1.bf16.msra.mxu0 %v572
    %715 = vmatprep.subr.bf16.mxu0 %v577
    %716 = vmatpush1.bf16.msra.mxu0 %v576
    %717 = vmatprep.mubr.bf16.mxu0 %v235
    %718 = vmatmul.mubr.bf16.gmra.mrb[0].mxu0 %v234
    %v719 = vpop.f32.mrb[0].mxu0
    %v720 = vadd.f32 %v313, %v719
    %v721 = vpop.f32.mrb[0].mxu0
    %v722 = vadd.f32 %v317, %v721
    %v723 = vpop.f32.mrb[0].mxu0
    %v724 = vadd.f32 %v313, %v723
    %v725 = vpop.f32.mrb[0].mxu0
    %v726 = vadd.f32 %v317, %v725
    %727 = vdwg.mxu0
    %728 = vst [vmem:[#allocation9] sm:$0xff] %v677
    %729 = vst [vmem:[#allocation9 + $0x8] sm:$0xff] %v679
    %730 = vst [vmem:[#allocation9 + $0x10] sm:$0xff] %v720
    %731 = vst [vmem:[#allocation9 + $0x18] sm:$0xff] %v722
    %732 = vst [vmem:[#allocation9 + $0x20] sm:$0xff] %v681
    %733 = vst [vmem:[#allocation9 + $0x28] sm:$0xff] %v683
    %734 = vst [vmem:[#allocation9 + $0x30] sm:$0xff] %v724
    %735 = vst [vmem:[#allocation9 + $0x38] sm:$0xff] %v726
    // Predicated region
    $region38: #{tpu_custom_call.1} parent=1 // pred_check
      _
    $region39: #{tpu_custom_call.1} parent=1 // pred_check_branch
      %737 = sbr.rel (0) target = $region41
    $region40: #{tpu_custom_call.1} parent=1 // pred_region
      %s739 = ssub.s32 1024, 1024
      %740 = vsyncadd [#allocation5], %s739
      %s741 = sshll.u32 [#allocation9], 4
      %s742 = int_to_ptr.vmem [resolvable:$true] %s741
      %747 = dma.vmem_to_hbm [thread:$0]  %s742, 1024, %s5, [#allocation5], 512, 512, 32
    $region41: #{tpu_custom_call.1} parent=1 // pred_fallthru
      _
    // Predicated region
    $region42: #{tpu_custom_call.1} parent=1 // pred_check
      _
    $region43: #{tpu_custom_call.1} parent=1 // pred_check_branch
      %749 = sbr.rel (0) target = $region45
    $region44: #{tpu_custom_call.1} parent=1 // pred_region
      %750 = dma.done [#allocation5], 1024
    $region45: #{tpu_custom_call.1} parent=1 // pred_fallthru
      _
    %751 = vsyncpa [#allocation4], 1
    %752 = vsyncpa [#allocation7], 1
    %753 = vsyncpa [#allocation5], 1

</llo_original>
